<compile_context>
chip_gen: v6e
topology: v6e:2x2x1
jax: 0.10.0
libtpu: 0.0.40
codegen_flags: <defaults>
</compile_context>

<pallas_src>
import functools

import jax
import jax.numpy as jnp
from jax.experimental import pallas as pl
from jax.experimental.pallas import tpu as pltpu


def _round_up(x, m):
    return ((x + m - 1) // m) * m


def _length_embedder_kernel(x_ref, w_ref, b_ref, o_ref, *,
                            latent_dim, w2_row_start, hidden_pad):
    # x_ref: (tile_b, latent_dim) f32   raw input rows (cast to bf16 here)
    # w_ref: (latent_align + H_pad, H_pad) bf16 packed [w1 ; w2]  (VMEM-resident)
    # b_ref: (2, H_pad) f32 packed [b1 ; b2]                      (VMEM-resident)
    # o_ref: (tile_b, H_pad) f32        lane-dense output slab
    x = x_ref[...].astype(w_ref.dtype)                    # bf16 MXU input
    w1 = w_ref[0:latent_dim, :]                           # static views, free
    w2 = w_ref[w2_row_start:w2_row_start + hidden_pad, :]
    b = b_ref[...]                                        # (2, H_pad) f32
    b1 = b[0:1, :]
    b2 = b[1:2, :]

    # Layer 1: bf16 MXU inputs, f32 accumulation, f32 bias add.
    h = jnp.dot(x, w1, preferred_element_type=jnp.float32) + b1
    # SiLU in f32 (sigmoid lands on the EUP slot; f32 is safe on v5e).
    h = h * jax.nn.sigmoid(h)
    # Layer 2: bf16 MXU inputs, f32 accumulation, f32 bias add.
    o = jnp.dot(h.astype(w_ref.dtype), w2,
                preferred_element_type=jnp.float32) + b2
    o_ref[...] = o.astype(o_ref.dtype)


def pad_params(w1, b1, w2, b2, compute_dtype=jnp.bfloat16):
    """One-time prep: pack + pad parameters into two lane-dense slabs.

    w1: (latent, hidden)  b1: (hidden,)  w2: (hidden, hidden)  b2: (hidden,)
    returns:
      w_packed: (latent_align + H_pad, H_pad) bf16
                rows [0:latent)                 = w1
                rows [latent_align : +hidden)   = w2   (latent_align = rnd16)
      b_packed: (2, H_pad) f32   row 0 = b1, row 1 = b2
    """
    latent_dim, hidden = w1.shape
    la = _round_up(latent_dim, 16)      # bf16 sublane tile -> w2 view aligned
    hp = _round_up(hidden, 128)         # lane-dense output / hidden width

    w_packed = jnp.zeros((la + hp, hp), compute_dtype)
    w_packed = w_packed.at[:latent_dim, :hidden].set(w1.astype(compute_dtype))
    w_packed = w_packed.at[la:la + hidden, :hidden].set(w2.astype(compute_dtype))

    b_packed = jnp.zeros((2, hp), jnp.float32)
    b_packed = b_packed.at[0, :hidden].set(jnp.reshape(b1, (-1,)).astype(jnp.float32))
    b_packed = b_packed.at[1, :hidden].set(jnp.reshape(b2, (-1,)).astype(jnp.float32))
    return w_packed, b_packed


def length_embedder(length, w_packed, b_packed, latent_dim, *, max_block_b=256):
    """Pallas forward pass of LengthEmbedder.

    length:   (B, latent_dim) float32 -- B may be (batch x diffusion steps)
              stacked to amortize the call and fill MXU rows.
    w_packed, b_packed: outputs of pad_params().
    returns:  padded (B_pad, H_pad) float32 slab.  The logical result is
              out[:B, :len_embed_dim]; indexing is left to the consumer.
    """
    B = length.shape[0]
    assert length.shape[1] == latent_dim
    total_rows, h_pad = w_packed.shape
    latent_align = total_rows - h_pad

    tile_b = min(max_block_b, _round_up(max(B, 8), 8))
    b_pad = _round_up(B, tile_b)
    x = length
    if b_pad != B:                      # single wrapper-side op (batch dim only)
        x = jnp.pad(length, ((0, b_pad - B), (0, 0)))
    grid = (b_pad // tile_b,)

    kernel = functools.partial(
        _length_embedder_kernel,
        latent_dim=latent_dim, w2_row_start=latent_align, hidden_pad=h_pad)

    flops = (2 * b_pad * latent_dim * h_pad
             + 2 * b_pad * h_pad * h_pad
             + 4 * b_pad * h_pad)
    bytes_accessed = (x.size * x.dtype.itemsize
                      + w_packed.size * w_packed.dtype.itemsize
                      + b_packed.size * b_packed.dtype.itemsize
                      + b_pad * h_pad * 4)

    return pl.pallas_call(
        kernel,
        out_shape=jax.ShapeDtypeStruct((b_pad, h_pad), jnp.float32),
        grid=grid,
        in_specs=[
            # x / out pipeline along the batch-tile grid axis ...
            pl.BlockSpec((tile_b, latent_dim), lambda i: (i, 0)),
            # ... while the packed weights / biases keep a constant block
            # index, so they are DMA'd once and stay VMEM-resident.
            pl.BlockSpec((total_rows, h_pad), lambda i: (0, 0)),
            pl.BlockSpec((2, h_pad), lambda i: (0, 0)),
        ],
        out_specs=pl.BlockSpec((tile_b, h_pad), lambda i: (i, 0)),
        compiler_params=pltpu.CompilerParams(
            # Batch tiles are independent, but for a call this small the
            # second v7x TensorCore is pure overhead -> keep "arbitrary".
            dimension_semantics=("arbitrary",)),
        cost_estimate=pl.CostEstimate(
            flops=flops,
            transcendentals=b_pad * h_pad,          # sigmoid on the EUP
            bytes_accessed=bytes_accessed),
    )(x, w_packed, b_packed)


def init_params(key, latent_dim, len_embed_dim, dtype=jnp.float32):
    """Deterministic init mimicking nn.Linear (uniform(-1/sqrt(fan_in), ...))."""
    k1, k2, k3, k4 = jax.random.split(key, 4)
    lim1 = 1.0 / (latent_dim ** 0.5)
    lim2 = 1.0 / (len_embed_dim ** 0.5)
    w1 = jax.random.uniform(k1, (latent_dim, len_embed_dim), dtype, -lim1, lim1)
    b1 = jax.random.uniform(k2, (len_embed_dim,), dtype, -lim1, lim1)
    w2 = jax.random.uniform(k3, (len_embed_dim, len_embed_dim), dtype, -lim2, lim2)
    b2 = jax.random.uniform(k4, (len_embed_dim,), dtype, -lim2, lim2)
    return w1, b1, w2, b2


def reference_f32(length, w1, b1, w2, b2):
    """Pure f32 math, identical to the PyTorch module."""
    h = length @ w1 + b1
    h = h * jax.nn.sigmoid(h)
    return h @ w2 + b2


def reference_matched(length, w1, b1, w2, b2, cd=jnp.bfloat16):
    """Same math with bf16 matmul inputs / f32 accumulation (kernel numerics)."""
    h = jnp.dot(length.astype(cd), w1.astype(cd),
                preferred_element_type=jnp.float32) + b1
    h = h * jax.nn.sigmoid(h)
    o = jnp.dot(h.astype(cd), w2.astype(cd),
                preferred_element_type=jnp.float32) + b2
    return o


if __name__ == "__main__":
    latent_dim = 32
    len_embed_dim = 64
    batch = 2

    key = jax.random.PRNGKey(0)
    k_in, k_params = jax.random.split(key)
    length = jax.random.normal(k_in, (batch, latent_dim), jnp.float32)
    w1, b1, w2, b2 = init_params(k_params, latent_dim, len_embed_dim)

    # One-time weight prep (pack + pad + bf16 cast).
    w_packed, b_packed = pad_params(w1, b1, w2, b2)

    out_pad = length_embedder(length, w_packed, b_packed, latent_dim)
    out_pad = jax.block_until_ready(out_pad)
    assert out_pad.shape[1] % 128 == 0 and out_pad.shape[0] >= batch

    # Consumer-side indexing of the padded slab -> logical (B, len_embed_dim).
    out = out_pad[:batch, :len_embed_dim]

    # Tight check against a reference that uses the same bf16-matmul numerics.
    ref_m = reference_matched(length, w1, b1, w2, b2)
    assert jnp.allclose(out, ref_m, atol=2e-3, rtol=2e-3), \
        "mismatch vs bf16-matched reference"

    # Loose check against the pure f32 PyTorch-equivalent math
    # (difference is only bf16 quantization of the matmul inputs).
    ref_f = reference_f32(length, w1, b1, w2, b2)
    assert jnp.allclose(out, ref_f, atol=3e-2, rtol=3e-2), \
        "mismatch vs f32 reference"

    # Padded columns are exact zeros (padded weight/bias lanes are zero);
    # padded rows are NOT zero (they see b1/b2), hence the [:batch] indexing.
    assert jnp.all(out_pad[:batch, len_embed_dim:] == 0.0)

    print("KERNEL_OK")
</pallas_src>

<mosaic_0001>
module attributes {stable_mosaic.version = 11 : i64} {
  func.func @_length_embedder_kernel(%arg0: i32, %arg1: memref<8x32xf32, #tpu.memory_space<vmem>>, %arg2: memref<160x128xbf16, #tpu.memory_space<vmem>>, %arg3: memref<2x128xf32, #tpu.memory_space<vmem>>, %arg4: memref<8x128xf32, #tpu.memory_space<vmem>>) attributes {dimension_semantics = [#tpu.dimension_semantics<arbitrary>], iteration_bounds = array<i64: 1>, scalar_prefetch = 0 : i64, scratch_operands = 0 : i64, tpu.core_type = #tpu.core_type<tc>, window_params = [{transform_indices = @transform_0, window_bounds = array<i64: 8, 32>}, {pipeline_mode = #tpu.pipeline_mode<synchronous>, transform_indices = @transform_1, window_bounds = array<i64: 160, 128>}, {pipeline_mode = #tpu.pipeline_mode<synchronous>, transform_indices = @transform_2, window_bounds = array<i64: 2, 128>}, {transform_indices = @transform_3, window_bounds = array<i64: 8, 128>}]} {
    %c0 = arith.constant 0 : index
    %c0_0 = arith.constant 0 : index
    %0 = vector.load %arg1[%c0, %c0_0] : memref<8x32xf32, #tpu.memory_space<vmem>>, vector<8x32xf32>
    %1 = arith.truncf %0 : vector<8x32xf32> to vector<8x32xbf16>
    %c0_1 = arith.constant 0 : index
    %c0_2 = arith.constant 0 : index
    %2 = vector.load %arg2[%c0_1, %c0_2] : memref<160x128xbf16, #tpu.memory_space<vmem>>, vector<32x128xbf16>
    %c32 = arith.constant 32 : index
    %c0_3 = arith.constant 0 : index
    %3 = vector.load %arg2[%c32, %c0_3] : memref<160x128xbf16, #tpu.memory_space<vmem>>, vector<128x128xbf16>
    %c0_4 = arith.constant 0 : index
    %c0_5 = arith.constant 0 : index
    %4 = vector.load %arg3[%c0_4, %c0_5] : memref<2x128xf32, #tpu.memory_space<vmem>>, vector<2x128xf32>
    %5 = vector.extract_strided_slice %4 {offsets = [0, 0], sizes = [1, 128], strides = [1, 1]} : vector<2x128xf32> to vector<1x128xf32>
    %6 = vector.extract_strided_slice %4 {offsets = [1, 0], sizes = [1, 128], strides = [1, 1]} : vector<2x128xf32> to vector<1x128xf32>
    %cst = arith.constant dense<0.000000e+00> : vector<8x128xf32>
    %7 = tpu.matmul %1, %2, %cst {dimension_numbers = #tpu.dot_dimension_numbers<[1], [0], [0], [1], [0, 0, 1, 1], [], []>} : vector<8x32xbf16>, vector<32x128xbf16>, vector<8x128xf32> -> vector<8x128xf32>
    %8 = vector.broadcast %5 : vector<1x128xf32> to vector<8x128xf32>
    %9 = arith.addf %7, %8 : vector<8x128xf32>
    %10 = arith.negf %9 : vector<8x128xf32>
    %11 = math.exp %10 : vector<8x128xf32>
    %cst_6 = arith.constant 1.000000e+00 : f32
    %12 = vector.broadcast %cst_6 : f32 to vector<8x128xf32>
    %13 = arith.addf %12, %11 : vector<8x128xf32>
    %14 = arith.divf %12, %13 : vector<8x128xf32>
    %15 = arith.mulf %9, %14 : vector<8x128xf32>
    %16 = arith.truncf %15 : vector<8x128xf32> to vector<8x128xbf16>
    %cst_7 = arith.constant dense<0.000000e+00> : vector<8x128xf32>
    %17 = tpu.matmul %16, %3, %cst_7 {dimension_numbers = #tpu.dot_dimension_numbers<[1], [0], [0], [1], [0, 0, 1, 1], [], []>} : vector<8x128xbf16>, vector<128x128xbf16>, vector<8x128xf32> -> vector<8x128xf32>
    %18 = vector.broadcast %6 : vector<1x128xf32> to vector<8x128xf32>
    %19 = arith.addf %17, %18 : vector<8x128xf32>
    %c0_8 = arith.constant 0 : index
    %c0_9 = arith.constant 0 : index
    %20 = vector.load %arg4[%c0_8, %c0_9] : memref<8x128xf32, #tpu.memory_space<vmem>>, vector<8x128xf32>
    tpu.vector_store %arg4[%c0_8, %c0_9], %19 {strides = array<i32>} : memref<8x128xf32, #tpu.memory_space<vmem>>, vector<8x128xf32>,
    return
  }
  func.func @transform_0(%arg0: i32) -> (i32, i32) {
    %c0_i32 = arith.constant 0 : i32
    %c0_i32_0 = arith.constant 0 : i32
    return %arg0, %c0_i32 : i32, i32
  }
  func.func @transform_1(%arg0: i32) -> (i32, i32) {
    %c0_i32 = arith.constant 0 : i32
    %c0_i32_0 = arith.constant 0 : i32
    %c0_i32_1 = arith.constant 0 : i32
    return %c0_i32, %c0_i32_0 : i32, i32
  }
  func.func @transform_2(%arg0: i32) -> (i32, i32) {
    %c0_i32 = arith.constant 0 : i32
    %c0_i32_0 = arith.constant 0 : i32
    %c0_i32_1 = arith.constant 0 : i32
    return %c0_i32, %c0_i32_0 : i32, i32
  }
  func.func @transform_3(%arg0: i32) -> (i32, i32) {
    %c0_i32 = arith.constant 0 : i32
    %c0_i32_0 = arith.constant 0 : i32
    return %arg0, %c0_i32 : i32, i32
  }
}

</mosaic_0001>

<llo_original>
// kernel: tpu_custom_call.1
$region0: #{tpu_custom_call.1}
  #allocation0 [shape = 'u32[]', space=smem, size = 0x4, offset = 0x4, fixed_abs, tag = 'smem constant byte address 0x4 - core index']
  #allocation1 [shape = 'u32[144,128]{1,0:T(1,128)}', space=vmem, size = 0x12000, scoped, tag = 'internal scratch']
  %s0 = inlined_call_operand.hbm [shape: f32[8,32], index: 0, kind: input, shape index: {}]
  %s1 = inlined_call_operand.hbm [shape: bf16[160,128], index: 1, kind: input, shape index: {}]
  %s2 = inlined_call_operand.vmem [shape: f32[2,128], index: 2, kind: input, shape index: {}]
  %s3 = inlined_call_operand.hbm [shape: f32[8,128], index: 3, kind: output, shape index: {}]
  %s4 = sld [smem:[#allocation0]]
  $region30: #{tpu_custom_call.1} parent=0
    _
  %s6 = ssub.s32 1, %s4
  %s7 = scalar_select 0, %s6, %s4
  $region1: #{tpu_custom_call.1} parent=0
    #allocation2 [shape = 'u8[4096]{0}', space=vmem, size = 0x1000, scoped, tag = 'input window, operand 0, single buffered']
    #allocation3 [shape = 's32[1]{0}', space=sflag, size = 0x4, scoped, tag = 'scoped memory for tpu_custom_call.1']
    #allocation4 [shape = 's32[1]{0}', space=sflag, size = 0x4, scoped, tag = 'scoped memory for tpu_custom_call.1']
    #allocation5 [shape = 'u8[40960]{0}', space=vmem, size = 0xa000, scoped, tag = 'input window, operand 1, single buffered']
    #allocation6 [shape = 's32[1]{0}', space=sflag, size = 0x4, scoped, tag = 'scoped memory for tpu_custom_call.1']
    #allocation7 [shape = 'u8[4096]{0}', space=vmem, size = 0x1000, scoped, tag = 'output window, operand 0, single buffered']
    %8 = vsyncpa [#allocation3], 0
    %9 = vsyncpa [#allocation6], 0
    %10 = vsyncpa [#allocation4], 0
    // Predicated region
    $region2: #{tpu_custom_call.1} parent=1 // pred_check
      _
    $region3: #{tpu_custom_call.1} parent=1 // pred_check_branch
      %12 = sbr.rel (0) target = $region5
    $region4: #{tpu_custom_call.1} parent=1 // pred_region
      %s14 = ssub.s32 128, 128
      %15 = vsyncadd [#allocation3], %s14
      %s17 = sshll.u32 [#allocation2], 4
      %s18 = int_to_ptr.vmem [resolvable:$true] %s17
      %20 = dma.hbm_to_vmem [thread:$0]  %s0, 128, %s18, [#allocation3]
    $region5: #{tpu_custom_call.1} parent=1 // pred_fallthru
      _
    // Predicated region
    $region6: #{tpu_custom_call.1} parent=1 // pred_check
      _
    $region7: #{tpu_custom_call.1} parent=1 // pred_check_branch
      %22 = sbr.rel (0) target = $region9
    $region8: #{tpu_custom_call.1} parent=1 // pred_region
      %s24 = ssub.s32 1280, 1280
      %25 = vsyncadd [#allocation6], %s24
      %s26 = sshll.u32 [#allocation5], 4
      %s27 = int_to_ptr.vmem [resolvable:$true] %s26
      %32 = dma.hbm_to_vmem [thread:$0]  %s1, 1280, %s27, [#allocation6], 64, 64, 4
    $region9: #{tpu_custom_call.1} parent=1 // pred_fallthru
      _
    // Predicated region
    $region10: #{tpu_custom_call.1} parent=1 // pred_check
      _
    $region11: #{tpu_custom_call.1} parent=1 // pred_check_branch
      %34 = sbr.rel (0) target = $region13
    $region12: #{tpu_custom_call.1} parent=1 // pred_region
      _
    $region13: #{tpu_custom_call.1} parent=1 // pred_fallthru
      _
    // Predicated region
    $region14: #{tpu_custom_call.1} parent=1 // pred_check
      _
    $region15: #{tpu_custom_call.1} parent=1 // pred_check_branch
      %36 = sbr.rel (0) target = $region17
    $region16: #{tpu_custom_call.1} parent=1 // pred_region
      %37 = dma.done [#allocation3], 128
    $region17: #{tpu_custom_call.1} parent=1 // pred_fallthru
      _
    // Predicated region
    $region18: #{tpu_custom_call.1} parent=1 // pred_check
      _
    $region19: #{tpu_custom_call.1} parent=1 // pred_check_branch
      %39 = sbr.rel (0) target = $region21
    $region20: #{tpu_custom_call.1} parent=1 // pred_region
      %40 = dma.done [#allocation6], 1280
    $region21: #{tpu_custom_call.1} parent=1 // pred_fallthru
      _
    %v42 = vld [vmem:[#allocation2] sm:$0xff]
    %v43 = vpack.c.bf16 %v42, %v42
    %v44 = vld [vmem:[#allocation5] sm:$0xf]
    %v45 = vld [vmem:[#allocation5 + $0x4] sm:$0xf]
    %v46 = vld [vmem:[#allocation5 + $0x8] sm:$0xf]
    %v47 = vld [vmem:[#allocation5 + $0xc] sm:$0xf]
    %v48 = vld [vmem:[#allocation5 + $0x10] sm:$0xf]
    %v49 = vld [vmem:[#allocation5 + $0x14] sm:$0xf]
    %v50 = vld [vmem:[#allocation5 + $0x18] sm:$0xf]
    %v51 = vld [vmem:[#allocation5 + $0x1c] sm:$0xf]
    %v52 = vld [vmem:[#allocation5 + $0x20] sm:$0xf]
    %v53 = vld [vmem:[#allocation5 + $0x24] sm:$0xf]
    %v54 = vld [vmem:[#allocation5 + $0x28] sm:$0xf]
    %v55 = vld [vmem:[#allocation5 + $0x2c] sm:$0xf]
    %v56 = vld [vmem:[#allocation5 + $0x30] sm:$0xf]
    %v57 = vld [vmem:[#allocation5 + $0x34] sm:$0xf]
    %v58 = vld [vmem:[#allocation5 + $0x38] sm:$0xf]
    %v59 = vld [vmem:[#allocation5 + $0x3c] sm:$0xf]
    %v60 = vld [vmem:[#allocation5 + $0x40] sm:$0xf]
    %v61 = vld [vmem:[#allocation5 + $0x44] sm:$0xf]
    %v62 = vld [vmem:[#allocation5 + $0x48] sm:$0xf]
    %v63 = vld [vmem:[#allocation5 + $0x4c] sm:$0xf]
    %v64 = vld [vmem:[%s2] sm:$0x3]
    %v65 = vlaneseq
    %v66 = vshrl.u32 %v65, 7
    %v67 = vsub.s32 0, %v66
    %v68 = vrot.slane %v64, %v67
    %v73 = vunpack.c.l.b16 %v44
    %v74 = vunpack.c.l.b16 %v45
    %v75 = vunpack.c.l.b16 %v46
    %v76 = vunpack.c.l.b16 %v47
    %v77 = vpack.c.b16 %v74, %v73
    %v78 = vpack.c.b16 %v76, %v75
    %vm81 = vcmask 261120
    %v83 = vsel %vm81, %v43, 0
    %85 = vmatprep.subr.bf16.mxu0 0
    %86 = vmatpush1.bf16.msra.mxu0 0
    %87 = vmatprep.subr.bf16.mxu0 0
    %88 = vmatpush1.bf16.msra.mxu0 0
    %89 = vmatprep.subr.bf16.mxu0 0
    %90 = vmatpush1.bf16.msra.mxu0 0
    %91 = vmatprep.subr.bf16.mxu0 0
    %92 = vmatpush1.bf16.msra.mxu0 0
    %93 = vmatprep.subr.bf16.mxu0 0
    %94 = vmatpush1.bf16.msra.mxu0 0
    %95 = vmatprep.subr.bf16.mxu0 0
    %96 = vmatpush1.bf16.msra.mxu0 0
    %97 = vmatprep.subr.bf16.mxu0 0
    %98 = vmatpush1.bf16.msra.mxu0 %v78
    %99 = vmatprep.subr.bf16.mxu0 0
    %100 = vmatpush1.bf16.msra.mxu0 %v77
    %101 = vmatprep.subr.bf16.mxu0 0
    %102 = vmatpush2.bf16.msra.mxu0 0
    %103 = vmatprep.subr.bf16.mxu0 0
    %104 = vmatpush2.bf16.msra.mxu0 0
    %105 = vmatprep.subr.bf16.mxu0 0
    %106 = vmatpush2.bf16.msra.mxu0 0
    %107 = vmatprep.subr.bf16.mxu0 0
    %108 = vmatpush2.bf16.msra.mxu0 0
    %109 = vmatprep.subr.bf16.mxu0 0
    %110 = vmatpush2.bf16.msra.mxu0 0
    %111 = vmatprep.subr.bf16.mxu0 0
    %112 = vmatpush2.bf16.msra.mxu0 0
    %113 = vmatprep.subr.bf16.mxu0 0
    %114 = vmatpush2.bf16.msra.mxu0 0
    %115 = vmatprep.subr.bf16.mxu0 0
    %116 = vmatpush2.bf16.msra.mxu0 0
    %117 = vmatprep.mubr.bf16.mxu0 0
    %118 = vmatmul.mubr.bf16.gmra.mxu0 %v83
    %v119 = vpop.f32.mrf.mxu0
    %v120 = vadd.f32 %v68, %v119
    %v121 = vpop.f32.mrf.mxu0
    %v122 = vpop.f32.mrf.mxu0
    %v123 = vpop.f32.mrf.mxu0
    %124 = vdwg.mxu0
    %v125 = vxor.u32 %v120, 2147483648
    %v126 = vmul.f32 %v125, 1.442695
    %v127 = vpow.pop %v126
    %v128 = vadd.f32 %v127, 1.0
    %v129 = vrcp.pop %v128
    %v130 = vmul.f32 1.0, %v129
    %v131 = vmul.f32 %v120, %v130
    %v132 = vpack.c.bf16 %v131, %v131
    %v133 = vlaneseq
    %v134 = vshrl.u32 %v133, 7
    %v135 = vsub.s32 1, %v134
    %v136 = vrot.slane %v64, %v135
    %v153 = vunpack.c.l.b16 %v48
    %v154 = vunpack.c.l.b16 %v49
    %v155 = vunpack.c.l.b16 %v50
    %v156 = vunpack.c.l.b16 %v51
    %v157 = vunpack.c.l.b16 %v52
    %v158 = vunpack.c.l.b16 %v53
    %v159 = vunpack.c.l.b16 %v54
    %v160 = vunpack.c.l.b16 %v55
    %v161 = vunpack.c.l.b16 %v56
    %v162 = vunpack.c.l.b16 %v57
    %v163 = vunpack.c.l.b16 %v58
    %v164 = vunpack.c.l.b16 %v59
    %v165 = vunpack.c.l.b16 %v60
    %v166 = vunpack.c.l.b16 %v61
    %v167 = vunpack.c.l.b16 %v62
    %v168 = vunpack.c.l.b16 %v63
    %v169 = vpack.c.b16 %v154, %v153
    %v170 = vpack.c.b16 %v156, %v155
    %v171 = vpack.c.b16 %v158, %v157
    %v172 = vpack.c.b16 %v160, %v159
    %v173 = vpack.c.b16 %v162, %v161
    %v174 = vpack.c.b16 %v164, %v163
    %v175 = vpack.c.b16 %v166, %v165
    %v176 = vpack.c.b16 %v168, %v167
    %185 = vmatprep.subr.bf16.mxu0 0
    %186 = vmatpush1.bf16.msra.mxu0 %v176
    %187 = vmatprep.subr.bf16.mxu0 0
    %188 = vmatpush1.bf16.msra.mxu0 %v175
    %189 = vmatprep.subr.bf16.mxu0 0
    %190 = vmatpush1.bf16.msra.mxu0 %v174
    %191 = vmatprep.subr.bf16.mxu0 0
    %192 = vmatpush1.bf16.msra.mxu0 %v173
    %193 = vmatprep.subr.bf16.mxu0 0
    %194 = vmatpush1.bf16.msra.mxu0 %v172
    %195 = vmatprep.subr.bf16.mxu0 0
    %196 = vmatpush1.bf16.msra.mxu0 %v171
    %197 = vmatprep.subr.bf16.mxu0 0
    %198 = vmatpush1.bf16.msra.mxu0 %v170
    %199 = vmatprep.subr.bf16.mxu0 0
    %200 = vmatpush1.bf16.msra.mxu0 %v169
    %201 = vmatprep.subr.bf16.mxu0 0
    %202 = vmatpush2.bf16.msra.mxu0 0
    %203 = vmatprep.subr.bf16.mxu0 0
    %204 = vmatpush2.bf16.msra.mxu0 0
    %205 = vmatprep.subr.bf16.mxu0 0
    %206 = vmatpush2.bf16.msra.mxu0 0
    %207 = vmatprep.subr.bf16.mxu0 0
    %208 = vmatpush2.bf16.msra.mxu0 0
    %209 = vmatprep.subr.bf16.mxu0 0
    %210 = vmatpush2.bf16.msra.mxu0 0
    %211 = vmatprep.subr.bf16.mxu0 0
    %212 = vmatpush2.bf16.msra.mxu0 0
    %213 = vmatprep.subr.bf16.mxu0 0
    %214 = vmatpush2.bf16.msra.mxu0 0
    %215 = vmatprep.subr.bf16.mxu0 0
    %216 = vmatpush2.bf16.msra.mxu0 0
    %217 = vmatprep.mubr.bf16.mxu0 0
    %218 = vmatmul.mubr.bf16.gmra.mxu0 %v132
    %v219 = vpop.f32.mrf.mxu0
    %v220 = vadd.f32 %v136, %v219
    %v221 = vpop.f32.mrf.mxu0
    %v222 = vpop.f32.mrf.mxu0
    %v223 = vpop.f32.mrf.mxu0
    %224 = vdwg.mxu0
    %225 = vst [vmem:[#allocation7] sm:$0xff] %v220
    // Predicated region
    $region22: #{tpu_custom_call.1} parent=1 // pred_check
      _
    $region23: #{tpu_custom_call.1} parent=1 // pred_check_branch
      %227 = sbr.rel (0) target = $region25
    $region24: #{tpu_custom_call.1} parent=1 // pred_region
      %s229 = ssub.s32 128, 128
      %230 = vsyncadd [#allocation4], %s229
      %s232 = sshll.u32 [#allocation7], 4
      %s233 = int_to_ptr.vmem [resolvable:$true] %s232
      %235 = dma.vmem_to_hbm [thread:$0]  %s233, 128, %s3, [#allocation4]
    $region25: #{tpu_custom_call.1} parent=1 // pred_fallthru
      _
    // Predicated region
    $region26: #{tpu_custom_call.1} parent=1 // pred_check
      _
    $region27: #{tpu_custom_call.1} parent=1 // pred_check_branch
      %237 = sbr.rel (0) target = $region29
    $region28: #{tpu_custom_call.1} parent=1 // pred_region
      %238 = dma.done [#allocation4], 128
    $region29: #{tpu_custom_call.1} parent=1 // pred_fallthru
      _
    %239 = vsyncpa [#allocation3], 1
    %240 = vsyncpa [#allocation6], 1
    %241 = vsyncpa [#allocation4], 1

</llo_original>
